<compile_context>
chip_gen: v6e
topology: v6e:2x2x1
jax: 0.10.0
libtpu: 0.0.40
codegen_flags: <defaults>
</compile_context>

<pallas_src>
import functools
import math

import jax
import jax.numpy as jnp
from jax.experimental import pallas as pl
from jax.experimental.pallas import tpu as pltpu


def _round_up(x, m):
    return ((x + m - 1) // m) * m


def _cdiv(a, b):
    return -(-a // b)


# --------------------------- fused QKV projection ----------------------------

def _qkv_proj_kernel(xq_ref, xk_ref, xv_ref, wq_ref, wk_ref, wv_ref,
                     bq_ref, bk_ref, bv_ref,
                     q_ref, k_ref, v_ref, kb_ref, *, neg_half_scale):
    # All matmuls accumulate in f32.  Wq/bq arrive pre-scaled by 1/sqrt(d_k).
    q = jnp.dot(xq_ref[...], wq_ref[...],
                preferred_element_type=jnp.float32) + bq_ref[...]
    k = jnp.dot(xk_ref[...], wk_ref[...],
                preferred_element_type=jnp.float32) + bk_ref[...]
    v = jnp.dot(xv_ref[...], wv_ref[...],
                preferred_element_type=jnp.float32) + bv_ref[...]
    q_ref[...] = q.astype(q_ref.dtype)
    k_ref[...] = k.astype(k_ref.dtype)
    v_ref[...] = v.astype(v_ref.dtype)
    # Fused epilogue: per-key-row additive score bias  -0.5*scale*||key||^2.
    kb_ref[...] = (neg_half_scale *
                   jnp.sum(k * k, axis=-1, keepdims=True)).astype(kb_ref.dtype)


def qkv_projection(xq, xk, xv, wq_t, bq, wk_t, bk, wv_t, bv, *, scale, tm=256):
    """Fused query/key/value projections.

    Returns (query_scaled, key, value_padded, key_bias) where value_padded has
    its last dim zero-padded to a multiple of 128 (lane-dense attention output)
    and key_bias has shape (B, 1, S) holding -0.5*scale*||key_row||^2.
    """
    assert xq.shape == xk.shape == xv.shape, "SelfAttention: q/k/v same shape"
    B, S, E = xq.shape
    Nq, Nk, Nv = wq_t.shape[1], wk_t.shape[1], wv_t.shape[1]

    # Pad the value path to 128 lanes (exact: padded columns are all-zero).
    Nvp = _round_up(Nv, 128)
    if Nvp != Nv:
        wv_t = jnp.pad(wv_t, ((0, 0), (0, Nvp - Nv)))
        bv = jnp.pad(bv, ((0, Nvp - Nv),))

    M = B * S
    xq2 = xq.reshape(M, E)
    xk2 = xk.reshape(M, E)
    xv2 = xv.reshape(M, E)

    tm = min(tm, _round_up(M, 8))
    Mp = _round_up(M, tm)
    if Mp != M:
        pad = ((0, Mp - M), (0, 0))
        xq2 = jnp.pad(xq2, pad)
        xk2 = jnp.pad(xk2, pad)
        xv2 = jnp.pad(xv2, pad)

    kernel = functools.partial(_qkv_proj_kernel, neg_half_scale=-0.5 * scale)

    q, k, v, kb = pl.pallas_call(
        kernel,
        out_shape=(
            jax.ShapeDtypeStruct((Mp, Nq), xq.dtype),
            jax.ShapeDtypeStruct((Mp, Nk), xk.dtype),
            jax.ShapeDtypeStruct((Mp, Nvp), xv.dtype),
            jax.ShapeDtypeStruct((Mp, 1), jnp.float32),
        ),
        grid_spec=pltpu.PrefetchScalarGridSpec(
            num_scalar_prefetch=0,
            grid=(Mp // tm,),
            in_specs=[
                pl.BlockSpec((tm, E), lambda i: (i, 0)),    # q activations
                pl.BlockSpec((tm, E), lambda i: (i, 0)),    # k activations
                pl.BlockSpec((tm, E), lambda i: (i, 0)),    # v activations
                pl.BlockSpec((E, Nq), lambda i: (0, 0)),    # resident weights
                pl.BlockSpec((E, Nk), lambda i: (0, 0)),
                pl.BlockSpec((E, Nvp), lambda i: (0, 0)),
                pl.BlockSpec((1, Nq), lambda i: (0, 0)),    # biases
                pl.BlockSpec((1, Nk), lambda i: (0, 0)),
                pl.BlockSpec((1, Nvp), lambda i: (0, 0)),
            ],
            out_specs=(
                pl.BlockSpec((tm, Nq), lambda i: (i, 0)),
                pl.BlockSpec((tm, Nk), lambda i: (i, 0)),
                pl.BlockSpec((tm, Nvp), lambda i: (i, 0)),
                pl.BlockSpec((tm, 1), lambda i: (i, 0)),
            ),
        ),
        compiler_params=pltpu.CompilerParams(
            dimension_semantics=("parallel",),
            vmem_limit_bytes=64 * 1024 * 1024),
    )(xq2, xk2, xv2, wq_t, wk_t, wv_t,
      bq.reshape(1, Nq), bk.reshape(1, Nk), bv.reshape(1, Nvp))

    if Mp != M:
        q, k, v, kb = q[:M], k[:M], v[:M], kb[:M]
    return (q.reshape(B, S, Nq), k.reshape(B, S, Nk),
            v.reshape(B, S, Nvp), kb.reshape(B, 1, S))


# ------------------------ Gaussian-score flash attention ----------------------

def _attention_kernel(q_ref, k_ref, v_ref, kb_ref, o_ref, m_sc, l_sc, acc_sc):
    ki = pl.program_id(2)

    @pl.when(ki == 0)
    def _():
        m_sc[...] = jnp.full_like(m_sc, -jnp.inf)
        l_sc[...] = jnp.zeros_like(l_sc)
        acc_sc[...] = jnp.zeros_like(acc_sc)

    q = q_ref[0]                                   # (tq, Dk), pre-scaled
    k = k_ref[0]                                   # (tk, Dk)

    # scores = (scale*q).k^T  +  (-0.5*scale*||k||^2  |  -inf on padded cols)
    # The -0.5*||q||^2 term is dropped: softmax is shift-invariant per row.
    s = jax.lax.dot_general(q, k, (((1,), (1,)), ((), ())),
                            preferred_element_type=jnp.float32)   # (tq, tk)
    s = s + kb_ref[0]                              # (1, tk) broadcast bias

    # Online softmax over the key (reduction) grid axis.
    m_prev = m_sc[...]
    m_new = jnp.maximum(m_prev, jnp.max(s, axis=-1, keepdims=True))
    alpha = jnp.exp(m_prev - m_new)
    p = jnp.exp(s - m_new)
    l_sc[...] = alpha * l_sc[...] + jnp.sum(p, axis=-1, keepdims=True)
    acc_sc[...] = alpha * acc_sc[...] + jnp.dot(
        p.astype(v_ref.dtype), v_ref[0], preferred_element_type=jnp.float32)
    m_sc[...] = m_new

    @pl.when(ki == pl.num_programs(2) - 1)
    def _():
        inv_l = pl.reciprocal(l_sc[...], approx=True)    # EUP slot, ~free
        o_ref[0] = (acc_sc[...] * inv_l).astype(o_ref.dtype)


def gaussian_attention(query, key, value, k_bias, *, tq=256, tk=256):
    """softmax(q.k^T + key_bias, axis=-1) @ value with streamed keys/values.

    query is expected to be pre-scaled; k_bias (B, 1, Sk) holds the per-key
    additive bias (-0.5*scale*||k||^2); padded key columns get -inf bias.
    """
    B, Sq, Dk = query.shape
    _, Sk, _ = key.shape
    Dv = value.shape[-1]

    tq = min(tq, _round_up(Sq, 8))
    tk = min(tk, _round_up(Sk, 8))
    # v7x has 2 TensorCores: keep at least 2 programs on the parallel axes.
    if B * _cdiv(Sq, tq) < 2 and Sq > 8:
        tq = _round_up(_cdiv(Sq, 2), 8)

    Sqp = _round_up(Sq, tq)
    Skp = _round_up(Sk, tk)
    if Sqp != Sq:
        query = jnp.pad(query, ((0, 0), (0, Sqp - Sq), (0, 0)))
    if Skp != Sk:
        key = jnp.pad(key, ((0, 0), (0, Skp - Sk), (0, 0)))
        value = jnp.pad(value, ((0, 0), (0, Skp - Sk), (0, 0)))
        # -inf bias on padded key columns doubles as the ragged-tail mask,
        # so the hot loop needs no iota/compare/select at all.
        k_bias = jnp.pad(k_bias, ((0, 0), (0, 0), (0, Skp - Sk)),
                         constant_values=-jnp.inf)

    out = pl.pallas_call(
        _attention_kernel,
        out_shape=jax.ShapeDtypeStruct((B, Sqp, Dv), query.dtype),
        grid_spec=pltpu.PrefetchScalarGridSpec(
            num_scalar_prefetch=0,
            grid=(B, Sqp // tq, Skp // tk),
            in_specs=[
                pl.BlockSpec((1, tq, Dk), lambda b, qi, ki: (b, qi, 0)),
                pl.BlockSpec((1, tk, Dk), lambda b, qi, ki: (b, ki, 0)),
                pl.BlockSpec((1, tk, Dv), lambda b, qi, ki: (b, ki, 0)),
                pl.BlockSpec((1, 1, tk), lambda b, qi, ki: (b, 0, ki)),
            ],
            out_specs=pl.BlockSpec((1, tq, Dv), lambda b, qi, ki: (b, qi, 0)),
            scratch_shapes=[
                pltpu.VMEM((tq, 1), jnp.float32),    # running max
                pltpu.VMEM((tq, 1), jnp.float32),    # running sum-exp
                pltpu.VMEM((tq, Dv), jnp.float32),   # output accumulator
            ],
        ),
        compiler_params=pltpu.CompilerParams(
            dimension_semantics=("parallel", "parallel", "arbitrary"),
            vmem_limit_bytes=64 * 1024 * 1024),
    )(query, key, value, k_bias)

    if Sqp != Sq:
        out = out[:, :Sq, :]
    return out


# ------------------------------ module forward --------------------------------

def self_attention_forward(q_in, k_in, v_in, params):
    """SelfAttention forward with default flags (value embed on, softmax over keys)."""
    d_v = params["bv"].shape[0]
    d_k = q_in.shape[-1]            # GenericAttention scales by sqrt(d_k == embed_dim)
    scale = 1.0 / math.sqrt(d_k)

    # Fold the score scale into the query projection (in a real model this
    # would be folded into the stored weights once, not per forward).
    query, key, value_p, k_bias = qkv_projection(
        q_in, k_in, v_in,
        params["wq_t"] * scale, params["bq"] * scale,
        params["wk_t"], params["bk"],
        params["wv_t"], params["bv"],
        scale=scale)

    out = gaussian_attention(query, key, value_p, k_bias)
    return out[..., :d_v]           # drop the lane padding of the value path
# TODO(synk): non-default GenericAttention options (mask=True diagonal -inf,
# is_state_transfer softmax over dim=1, return_attention, return_log) are not
# implemented; only the default SelfAttention forward path is translated.


def reference(q_in, k_in, v_in, params):
    query = q_in @ params["wq_t"] + params["bq"]
    key = k_in @ params["wk_t"] + params["bk"]
    value = v_in @ params["wv_t"] + params["bv"]
    aw = jnp.einsum("bqd,bkd->bqk", query, key)
    aw = aw - 0.5 * jnp.sum(jnp.square(query), axis=-1, keepdims=True)
    aw = aw - 0.5 * jnp.swapaxes(
        jnp.sum(jnp.square(key), axis=-1, keepdims=True), 1, 2)
    aw = aw / math.sqrt(q_in.shape[-1])
    aw = jax.nn.softmax(aw, axis=-1)
    return jnp.einsum("bqk,bkd->bqd", aw, value)


if __name__ == "__main__":
    # SelfAttention(embed_dim=32, d_ker=32, d_v=32) on (batch=2, seq=8, embed=32).
    B, S, E = 2, 8, 32
    d_ker, d_v = 32, 32

    root = jax.random.PRNGKey(0)
    kq, kk, kv, kwq, kbq, kwk, kbk, kwv, kbv = jax.random.split(root, 9)

    q_in = jax.random.normal(kq, (B, S, E), dtype=jnp.float32)
    k_in = jax.random.normal(kk, (B, S, E), dtype=jnp.float32)
    v_in = jax.random.normal(kv, (B, S, E), dtype=jnp.float32)

    def init_linear(kw, kb, fan_in, fan_out):
        bound = 1.0 / math.sqrt(fan_in)
        w = jax.random.uniform(kw, (fan_out, fan_in), minval=-bound,
                               maxval=bound, dtype=jnp.float32)  # torch (out, in)
        b = jax.random.uniform(kb, (fan_out,), minval=-bound,
                               maxval=bound, dtype=jnp.float32)
        return w.T, b   # kernels use W^T layout (in, out)

    wq_t, bq = init_linear(kwq, kbq, E, d_ker)
    wk_t, bk = init_linear(kwk, kbk, E, d_ker)
    wv_t, bv = init_linear(kwv, kbv, E, d_v)
    params = dict(wq_t=wq_t, bq=bq, wk_t=wk_t, bk=bk, wv_t=wv_t, bv=bv)

    out = self_attention_forward(q_in, k_in, v_in, params)
    jax.block_until_ready(out)

    ref = reference(q_in, k_in, v_in, params)
    assert out.shape == (B, S, d_v), out.shape
    max_err = float(jnp.max(jnp.abs(out - ref)))
    # Tolerance covers the EUP approximate-reciprocal softmax normalization.
    assert jnp.allclose(out, ref, atol=2e-3, rtol=2e-3), f"mismatch: {max_err}"

    print("KERNEL_OK")
</pallas_src>

<mosaic_0001>
module attributes {stable_mosaic.version = 11 : i64} {
  func.func @_qkv_proj_kernel(%arg0: i32, %arg1: memref<16x32xf32, #tpu.memory_space<vmem>>, %arg2: memref<16x32xf32, #tpu.memory_space<vmem>>, %arg3: memref<16x32xf32, #tpu.memory_space<vmem>>, %arg4: memref<32x32xf32, #tpu.memory_space<vmem>>, %arg5: memref<32x32xf32, #tpu.memory_space<vmem>>, %arg6: memref<32x128xf32, #tpu.memory_space<vmem>>, %arg7: memref<1x32xf32, #tpu.memory_space<vmem>>, %arg8: memref<1x32xf32, #tpu.memory_space<vmem>>, %arg9: memref<1x128xf32, #tpu.memory_space<vmem>>, %arg10: memref<16x32xf32, #tpu.memory_space<vmem>>, %arg11: memref<16x32xf32, #tpu.memory_space<vmem>>, %arg12: memref<16x128xf32, #tpu.memory_space<vmem>>, %arg13: memref<16x1xf32, #tpu.memory_space<vmem>>) attributes {dimension_semantics = [#tpu.dimension_semantics<parallel>], iteration_bounds = array<i64: 1>, scalar_prefetch = 0 : i64, scratch_operands = 0 : i64, tpu.core_type = #tpu.core_type<tc>, window_params = [{transform_indices = @transform_0, window_bounds = array<i64: 16, 32>}, {transform_indices = @transform_1, window_bounds = array<i64: 16, 32>}, {transform_indices = @transform_2, window_bounds = array<i64: 16, 32>}, {pipeline_mode = #tpu.pipeline_mode<synchronous>, transform_indices = @transform_3, window_bounds = array<i64: 32, 32>}, {pipeline_mode = #tpu.pipeline_mode<synchronous>, transform_indices = @transform_4, window_bounds = array<i64: 32, 32>}, {pipeline_mode = #tpu.pipeline_mode<synchronous>, transform_indices = @transform_5, window_bounds = array<i64: 32, 128>}, {pipeline_mode = #tpu.pipeline_mode<synchronous>, transform_indices = @transform_6, window_bounds = array<i64: 1, 32>}, {pipeline_mode = #tpu.pipeline_mode<synchronous>, transform_indices = @transform_7, window_bounds = array<i64: 1, 32>}, {pipeline_mode = #tpu.pipeline_mode<synchronous>, transform_indices = @transform_8, window_bounds = array<i64: 1, 128>}, {transform_indices = @transform_9, window_bounds = array<i64: 16, 32>}, {transform_indices = @transform_10, window_bounds = array<i64: 16, 32>}, {transform_indices = @transform_11, window_bounds = array<i64: 16, 128>}, {transform_indices = @transform_12, window_bounds = array<i64: 16, 1>}]} {
    %c0 = arith.constant 0 : index
    %c0_0 = arith.constant 0 : index
    %0 = vector.load %arg1[%c0, %c0_0] : memref<16x32xf32, #tpu.memory_space<vmem>>, vector<16x32xf32>
    %c0_1 = arith.constant 0 : index
    %c0_2 = arith.constant 0 : index
    %1 = vector.load %arg4[%c0_1, %c0_2] : memref<32x32xf32, #tpu.memory_space<vmem>>, vector<32x32xf32>
    %cst = arith.constant dense<0.000000e+00> : vector<16x32xf32>
    %2 = tpu.matmul %0, %1, %cst {dimension_numbers = #tpu.dot_dimension_numbers<[1], [0], [0], [1], [0, 0, 1, 1], [], []>} : vector<16x32xf32>, vector<32x32xf32>, vector<16x32xf32> -> vector<16x32xf32>
    %c0_3 = arith.constant 0 : index
    %c0_4 = arith.constant 0 : index
    %3 = vector.load %arg7[%c0_3, %c0_4] : memref<1x32xf32, #tpu.memory_space<vmem>>, vector<1x32xf32>
    %4 = vector.broadcast %3 : vector<1x32xf32> to vector<16x32xf32>
    %5 = arith.addf %2, %4 : vector<16x32xf32>
    %c0_5 = arith.constant 0 : index
    %c0_6 = arith.constant 0 : index
    %6 = vector.load %arg2[%c0_5, %c0_6] : memref<16x32xf32, #tpu.memory_space<vmem>>, vector<16x32xf32>
    %c0_7 = arith.constant 0 : index
    %c0_8 = arith.constant 0 : index
    %7 = vector.load %arg5[%c0_7, %c0_8] : memref<32x32xf32, #tpu.memory_space<vmem>>, vector<32x32xf32>
    %cst_9 = arith.constant dense<0.000000e+00> : vector<16x32xf32>
    %8 = tpu.matmul %6, %7, %cst_9 {dimension_numbers = #tpu.dot_dimension_numbers<[1], [0], [0], [1], [0, 0, 1, 1], [], []>} : vector<16x32xf32>, vector<32x32xf32>, vector<16x32xf32> -> vector<16x32xf32>
    %c0_10 = arith.constant 0 : index
    %c0_11 = arith.constant 0 : index
    %9 = vector.load %arg8[%c0_10, %c0_11] : memref<1x32xf32, #tpu.memory_space<vmem>>, vector<1x32xf32>
    %10 = vector.broadcast %9 : vector<1x32xf32> to vector<16x32xf32>
    %11 = arith.addf %8, %10 : vector<16x32xf32>
    %c0_12 = arith.constant 0 : index
    %c0_13 = arith.constant 0 : index
    %12 = vector.load %arg3[%c0_12, %c0_13] : memref<16x32xf32, #tpu.memory_space<vmem>>, vector<16x32xf32>
    %c0_14 = arith.constant 0 : index
    %c0_15 = arith.constant 0 : index
    %13 = vector.load %arg6[%c0_14, %c0_15] : memref<32x128xf32, #tpu.memory_space<vmem>>, vector<32x128xf32>
    %cst_16 = arith.constant dense<0.000000e+00> : vector<16x128xf32>
    %14 = tpu.matmul %12, %13, %cst_16 {dimension_numbers = #tpu.dot_dimension_numbers<[1], [0], [0], [1], [0, 0, 1, 1], [], []>} : vector<16x32xf32>, vector<32x128xf32>, vector<16x128xf32> -> vector<16x128xf32>
    %c0_17 = arith.constant 0 : index
    %c0_18 = arith.constant 0 : index
    %15 = vector.load %arg9[%c0_17, %c0_18] : memref<1x128xf32, #tpu.memory_space<vmem>>, vector<1x128xf32>
    %16 = vector.broadcast %15 : vector<1x128xf32> to vector<16x128xf32>
    %17 = arith.addf %14, %16 : vector<16x128xf32>
    %c0_19 = arith.constant 0 : index
    %c0_20 = arith.constant 0 : index
    %18 = vector.load %arg10[%c0_19, %c0_20] : memref<16x32xf32, #tpu.memory_space<vmem>>, vector<16x32xf32>
    tpu.vector_store %arg10[%c0_19, %c0_20], %5 {strides = array<i32>} : memref<16x32xf32, #tpu.memory_space<vmem>>, vector<16x32xf32>,
    %c0_21 = arith.constant 0 : index
    %c0_22 = arith.constant 0 : index
    %19 = vector.load %arg11[%c0_21, %c0_22] : memref<16x32xf32, #tpu.memory_space<vmem>>, vector<16x32xf32>
    tpu.vector_store %arg11[%c0_21, %c0_22], %11 {strides = array<i32>} : memref<16x32xf32, #tpu.memory_space<vmem>>, vector<16x32xf32>,
    %c0_23 = arith.constant 0 : index
    %c0_24 = arith.constant 0 : index
    %20 = vector.load %arg12[%c0_23, %c0_24] : memref<16x128xf32, #tpu.memory_space<vmem>>, vector<16x128xf32>
    tpu.vector_store %arg12[%c0_23, %c0_24], %17 {strides = array<i32>} : memref<16x128xf32, #tpu.memory_space<vmem>>, vector<16x128xf32>,
    %21 = arith.mulf %11, %11 : vector<16x32xf32>
    %cst_25 = arith.constant dense<0.000000e+00> : vector<16xf32>
    %22 = vector.multi_reduction <add>, %21, %cst_25 [1] : vector<16x32xf32> to vector<16xf32>
    %23 = vector.shape_cast %22 : vector<16xf32> to vector<16x1xf32>
    %cst_26 = arith.constant -0.0883883461 : f32
    %24 = vector.broadcast %cst_26 : f32 to vector<16x1xf32>
    %25 = arith.mulf %24, %23 : vector<16x1xf32>
    %c0_27 = arith.constant 0 : index
    %c0_28 = arith.constant 0 : index
    %26 = vector.load %arg13[%c0_27, %c0_28] : memref<16x1xf32, #tpu.memory_space<vmem>>, vector<16x1xf32>
    tpu.vector_store %arg13[%c0_27, %c0_28], %25 {strides = array<i32>} : memref<16x1xf32, #tpu.memory_space<vmem>>, vector<16x1xf32>,
    return
  }
  func.func @transform_0(%arg0: i32) -> (i32, i32) {
    %c0_i32 = arith.constant 0 : i32
    %c0_i32_0 = arith.constant 0 : i32
    return %arg0, %c0_i32 : i32, i32
  }
  func.func @transform_1(%arg0: i32) -> (i32, i32) {
    %c0_i32 = arith.constant 0 : i32
    %c0_i32_0 = arith.constant 0 : i32
    return %arg0, %c0_i32 : i32, i32
  }
  func.func @transform_2(%arg0: i32) -> (i32, i32) {
    %c0_i32 = arith.constant 0 : i32
    %c0_i32_0 = arith.constant 0 : i32
    return %arg0, %c0_i32 : i32, i32
  }
  func.func @transform_3(%arg0: i32) -> (i32, i32) {
    %c0_i32 = arith.constant 0 : i32
    %c0_i32_0 = arith.constant 0 : i32
    %c0_i32_1 = arith.constant 0 : i32
    return %c0_i32, %c0_i32_0 : i32, i32
  }
  func.func @transform_4(%arg0: i32) -> (i32, i32) {
    %c0_i32 = arith.constant 0 : i32
    %c0_i32_0 = arith.constant 0 : i32
    %c0_i32_1 = arith.constant 0 : i32
    return %c0_i32, %c0_i32_0 : i32, i32
  }
  func.func @transform_5(%arg0: i32) -> (i32, i32) {
    %c0_i32 = arith.constant 0 : i32
    %c0_i32_0 = arith.constant 0 : i32
    %c0_i32_1 = arith.constant 0 : i32
    return %c0_i32, %c0_i32_0 : i32, i32
  }
  func.func @transform_6(%arg0: i32) -> (i32, i32) {
    %c0_i32 = arith.constant 0 : i32
    %c0_i32_0 = arith.constant 0 : i32
    %c0_i32_1 = arith.constant 0 : i32
    return %c0_i32, %c0_i32_0 : i32, i32
  }
  func.func @transform_7(%arg0: i32) -> (i32, i32) {
    %c0_i32 = arith.constant 0 : i32
    %c0_i32_0 = arith.constant 0 : i32
    %c0_i32_1 = arith.constant 0 : i32
    return %c0_i32, %c0_i32_0 : i32, i32
  }
  func.func @transform_8(%arg0: i32) -> (i32, i32) {
    %c0_i32 = arith.constant 0 : i32
    %c0_i32_0 = arith.constant 0 : i32
    %c0_i32_1 = arith.constant 0 : i32
    return %c0_i32, %c0_i32_0 : i32, i32
  }
  func.func @transform_9(%arg0: i32) -> (i32, i32) {
    %c0_i32 = arith.constant 0 : i32
    %c0_i32_0 = arith.constant 0 : i32
    return %arg0, %c0_i32 : i32, i32
  }
  func.func @transform_10(%arg0: i32) -> (i32, i32) {
    %c0_i32 = arith.constant 0 : i32
    %c0_i32_0 = arith.constant 0 : i32
    return %arg0, %c0_i32 : i32, i32
  }
  func.func @transform_11(%arg0: i32) -> (i32, i32) {
    %c0_i32 = arith.constant 0 : i32
    %c0_i32_0 = arith.constant 0 : i32
    return %arg0, %c0_i32 : i32, i32
  }
  func.func @transform_12(%arg0: i32) -> (i32, i32) {
    %c0_i32 = arith.constant 0 : i32
    %c0_i32_0 = arith.constant 0 : i32
    return %arg0, %c0_i32 : i32, i32
  }
}

</mosaic_0001>

<llo_original>
// kernel: tpu_custom_call.1
$region0: #{tpu_custom_call.1}
  #allocation0 [shape = 'u32[]', space=smem, size = 0x4, offset = 0x4, fixed_abs, tag = 'smem constant byte address 0x4 - core index']
  #allocation1 [shape = 'u32[144,128]{1,0:T(1,128)}', space=vmem, size = 0x12000, scoped, tag = 'internal scratch']
  %s0 = inlined_call_operand.hbm [shape: f32[16,32], index: 0, kind: input, shape index: {}]
  %s1 = inlined_call_operand.hbm [shape: f32[16,32], index: 1, kind: input, shape index: {}]
  %s2 = inlined_call_operand.hbm [shape: f32[16,32], index: 2, kind: input, shape index: {}]
  %s3 = inlined_call_operand.hbm [shape: f32[32,32], index: 3, kind: input, shape index: {}]
  %s4 = inlined_call_operand.hbm [shape: f32[32,32], index: 4, kind: input, shape index: {}]
  %s5 = inlined_call_operand.hbm [shape: f32[32,128], index: 5, kind: input, shape index: {}]
  %s6 = inlined_call_operand.vmem [shape: f32[1,32], index: 6, kind: input, shape index: {}]
  %s7 = inlined_call_operand.vmem [shape: f32[1,32], index: 7, kind: input, shape index: {}]
  %s8 = inlined_call_operand.vmem [shape: f32[1,128], index: 8, kind: input, shape index: {}]
  %s9 = inlined_call_operand.hbm [shape: f32[16,32], index: 9, kind: output, shape index: {0}]
  %s10 = inlined_call_operand.hbm [shape: f32[16,32], index: 10, kind: output, shape index: {1}]
  %s11 = inlined_call_operand.hbm [shape: f32[16,128], index: 11, kind: output, shape index: {2}]
  %s12 = inlined_call_operand.vmem [shape: f32[16,1], index: 12, kind: output, shape index: {3}]
  %13 = xla_tuple %s9, %s10, %s11, %s12
  %s14 = sld [smem:[#allocation0]]
  $region94: #{tpu_custom_call.1} parent=0
    _
  %s16 = ssub.s32 1, %s14
  %s17 = scalar_select 0, %s16, %s14
  $region1: #{tpu_custom_call.1} parent=0
    #allocation2 [shape = 'u8[8192]{0}', space=vmem, size = 0x2000, scoped, tag = 'input window, operand 0, single buffered']
    #allocation3 [shape = 's32[1]{0}', space=sflag, size = 0x4, scoped, tag = 'scoped memory for tpu_custom_call.1']
    #allocation4 [shape = 's32[1]{0}', space=sflag, size = 0x4, scoped, tag = 'scoped memory for tpu_custom_call.1']
    #allocation5 [shape = 'u8[8192]{0}', space=vmem, size = 0x2000, scoped, tag = 'input window, operand 1, single buffered']
    #allocation6 [shape = 's32[1]{0}', space=sflag, size = 0x4, scoped, tag = 'scoped memory for tpu_custom_call.1']
    #allocation7 [shape = 'u8[8192]{0}', space=vmem, size = 0x2000, scoped, tag = 'input window, operand 2, single buffered']
    #allocation8 [shape = 'u8[16384]{0}', space=vmem, size = 0x4000, scoped, tag = 'input window, operand 3, single buffered']
    #allocation9 [shape = 's32[1]{0}', space=sflag, size = 0x4, scoped, tag = 'scoped memory for tpu_custom_call.1']
    #allocation10 [shape = 'u8[16384]{0}', space=vmem, size = 0x4000, scoped, tag = 'input window, operand 4, single buffered']
    #allocation11 [shape = 'u8[16384]{0}', space=vmem, size = 0x4000, scoped, tag = 'input window, operand 5, single buffered']
    #allocation12 [shape = 's32[1]{0}', space=sflag, size = 0x4, scoped, tag = 'scoped memory for tpu_custom_call.1']
    #allocation13 [shape = 'u8[8192]{0}', space=vmem, size = 0x2000, scoped, tag = 'output window, operand 0, single buffered']
    #allocation14 [shape = 'u8[8192]{0}', space=vmem, size = 0x2000, scoped, tag = 'output window, operand 1, single buffered']
    #allocation15 [shape = 's32[1]{0}', space=sflag, size = 0x4, scoped, tag = 'scoped memory for tpu_custom_call.1']
    #allocation16 [shape = 'u8[8192]{0}', space=vmem, size = 0x2000, scoped, tag = 'output window, operand 2, single buffered']
    %18 = vsyncpa [#allocation3], 0
    %19 = vsyncpa [#allocation6], 0
    %20 = vsyncpa [#allocation9], 0
    %21 = vsyncpa [#allocation12], 0
    %22 = vsyncpa [#allocation4], 0
    %23 = vsyncpa [#allocation15], 0
    // Predicated region
    $region2: #{tpu_custom_call.1} parent=1 // pred_check
      _
    $region3: #{tpu_custom_call.1} parent=1 // pred_check_branch
      %25 = sbr.rel (0) target = $region5
    $region4: #{tpu_custom_call.1} parent=1 // pred_region
      %s27 = ssub.s32 256, 256
      %28 = vsyncadd [#allocation3], %s27
      %s29 = sshll.u32 [#allocation2], 4
      %s30 = int_to_ptr.vmem [resolvable:$true] %s29
      %35 = dma.hbm_to_vmem [thread:$0]  %s0, 256, %s30, [#allocation3], 128, 128, 8
    $region5: #{tpu_custom_call.1} parent=1 // pred_fallthru
      _
    // Predicated region
    $region6: #{tpu_custom_call.1} parent=1 // pred_check
      _
    $region7: #{tpu_custom_call.1} parent=1 // pred_check_branch
      %37 = sbr.rel (0) target = $region9
    $region8: #{tpu_custom_call.1} parent=1 // pred_region
      %s39 = ssub.s32 256, 256
      %40 = vsyncadd [#allocation6], %s39
      %s41 = sshll.u32 [#allocation5], 4
      %s42 = int_to_ptr.vmem [resolvable:$true] %s41
      %47 = dma.hbm_to_vmem [thread:$0]  %s1, 256, %s42, [#allocation6], 128, 128, 8
    $region9: #{tpu_custom_call.1} parent=1 // pred_fallthru
      _
    // Predicated region
    $region10: #{tpu_custom_call.1} parent=1 // pred_check
      _
    $region11: #{tpu_custom_call.1} parent=1 // pred_check_branch
      %49 = sbr.rel (0) target = $region13
    $region12: #{tpu_custom_call.1} parent=1 // pred_region
      %s51 = ssub.s32 256, 256
      %52 = vsyncadd [#allocation6], %s51
      %s53 = sshll.u32 [#allocation7], 4
      %s54 = int_to_ptr.vmem [resolvable:$true] %s53
      %59 = dma.hbm_to_vmem [thread:$0]  %s2, 256, %s54, [#allocation6], 128, 128, 8
    $region13: #{tpu_custom_call.1} parent=1 // pred_fallthru
      _
    // Predicated region
    $region14: #{tpu_custom_call.1} parent=1 // pred_check
      _
    $region15: #{tpu_custom_call.1} parent=1 // pred_check_branch
      %61 = sbr.rel (0) target = $region17
    $region16: #{tpu_custom_call.1} parent=1 // pred_region
      %s63 = ssub.s32 512, 512
      %64 = vsyncadd [#allocation9], %s63
      %s65 = sshll.u32 [#allocation8], 4
      %s66 = int_to_ptr.vmem [resolvable:$true] %s65
      %71 = dma.hbm_to_vmem [thread:$0]  %s3, 512, %s66, [#allocation9], 128, 128, 8
    $region17: #{tpu_custom_call.1} parent=1 // pred_fallthru
      _
    // Predicated region
    $region18: #{tpu_custom_call.1} parent=1 // pred_check
      _
    $region19: #{tpu_custom_call.1} parent=1 // pred_check_branch
      %73 = sbr.rel (0) target = $region21
    $region20: #{tpu_custom_call.1} parent=1 // pred_region
      %s75 = ssub.s32 512, 512
      %76 = vsyncadd [#allocation9], %s75
      %s77 = sshll.u32 [#allocation10], 4
      %s78 = int_to_ptr.vmem [resolvable:$true] %s77
      %83 = dma.hbm_to_vmem [thread:$0]  %s4, 512, %s78, [#allocation9], 128, 128, 8
    $region21: #{tpu_custom_call.1} parent=1 // pred_fallthru
      _
    // Predicated region
    $region22: #{tpu_custom_call.1} parent=1 // pred_check
      _
    $region23: #{tpu_custom_call.1} parent=1 // pred_check_branch
      %85 = sbr.rel (0) target = $region25
    $region24: #{tpu_custom_call.1} parent=1 // pred_region
      %s87 = ssub.s32 512, 512
      %88 = vsyncadd [#allocation12], %s87
      %s89 = sshll.u32 [#allocation11], 4
      %s90 = int_to_ptr.vmem [resolvable:$true] %s89
      %95 = dma.hbm_to_vmem [thread:$0]  %s5, 512, %s90, [#allocation12], 128, 128, 8
    $region25: #{tpu_custom_call.1} parent=1 // pred_fallthru
      _
    // Predicated region
    $region26: #{tpu_custom_call.1} parent=1 // pred_check
      _
    $region27: #{tpu_custom_call.1} parent=1 // pred_check_branch
      %97 = sbr.rel (0) target = $region29
    $region28: #{tpu_custom_call.1} parent=1 // pred_region
      _
    $region29: #{tpu_custom_call.1} parent=1 // pred_fallthru
      _
    // Predicated region
    $region30: #{tpu_custom_call.1} parent=1 // pred_check
      _
    $region31: #{tpu_custom_call.1} parent=1 // pred_check_branch
      %99 = sbr.rel (0) target = $region33
    $region32: #{tpu_custom_call.1} parent=1 // pred_region
      _
    $region33: #{tpu_custom_call.1} parent=1 // pred_fallthru
      _
    // Predicated region
    $region34: #{tpu_custom_call.1} parent=1 // pred_check
      _
    $region35: #{tpu_custom_call.1} parent=1 // pred_check_branch
      %101 = sbr.rel (0) target = $region37
    $region36: #{tpu_custom_call.1} parent=1 // pred_region
      _
    $region37: #{tpu_custom_call.1} parent=1 // pred_fallthru
      _
    // Predicated region
    $region38: #{tpu_custom_call.1} parent=1 // pred_check
      _
    $region39: #{tpu_custom_call.1} parent=1 // pred_check_branch
      %103 = sbr.rel (0) target = $region41
    $region40: #{tpu_custom_call.1} parent=1 // pred_region
      %104 = dma.done [#allocation3], 256
    $region41: #{tpu_custom_call.1} parent=1 // pred_fallthru
      _
    // Predicated region
    $region42: #{tpu_custom_call.1} parent=1 // pred_check
      _
    $region43: #{tpu_custom_call.1} parent=1 // pred_check_branch
      %106 = sbr.rel (0) target = $region45
    $region44: #{tpu_custom_call.1} parent=1 // pred_region
      %107 = dma.done [#allocation6], 256
    $region45: #{tpu_custom_call.1} parent=1 // pred_fallthru
      _
    // Predicated region
    $region46: #{tpu_custom_call.1} parent=1 // pred_check
      _
    $region47: #{tpu_custom_call.1} parent=1 // pred_check_branch
      %109 = sbr.rel (0) target = $region49
    $region48: #{tpu_custom_call.1} parent=1 // pred_region
      %110 = dma.done [#allocation6], 256
    $region49: #{tpu_custom_call.1} parent=1 // pred_fallthru
      _
    // Predicated region
    $region50: #{tpu_custom_call.1} parent=1 // pred_check
      _
    $region51: #{tpu_custom_call.1} parent=1 // pred_check_branch
      %112 = sbr.rel (0) target = $region53
    $region52: #{tpu_custom_call.1} parent=1 // pred_region
      %113 = dma.done [#allocation9], 512
    $region53: #{tpu_custom_call.1} parent=1 // pred_fallthru
      _
    // Predicated region
    $region54: #{tpu_custom_call.1} parent=1 // pred_check
      _
    $region55: #{tpu_custom_call.1} parent=1 // pred_check_branch
      %115 = sbr.rel (0) target = $region57
    $region56: #{tpu_custom_call.1} parent=1 // pred_region
      %116 = dma.done [#allocation9], 512
    $region57: #{tpu_custom_call.1} parent=1 // pred_fallthru
      _
    // Predicated region
    $region58: #{tpu_custom_call.1} parent=1 // pred_check
      _
    $region59: #{tpu_custom_call.1} parent=1 // pred_check_branch
      %118 = sbr.rel (0) target = $region61
    $region60: #{tpu_custom_call.1} parent=1 // pred_region
      %119 = dma.done [#allocation12], 512
    $region61: #{tpu_custom_call.1} parent=1 // pred_fallthru
      _
    %v120 = vld [vmem:[#allocation2] sm:$0xff]
    %v121 = vld [vmem:[#allocation2 + $0x8] sm:$0xff]
    %v122 = vld [vmem:[#allocation8] sm:$0xff]
    %v123 = vld [vmem:[#allocation8 + $0x8] sm:$0xff]
    %v124 = vld [vmem:[#allocation8 + $0x10] sm:$0xff]
    %v125 = vld [vmem:[#allocation8 + $0x18] sm:$0xff]
    %v126 = vld [vmem:[%s6] sm:$0x1]
    %v128 = vlaneseq
    %v129 = vshrl.u32 %v128, 7
    %v130 = vsub.s32 0, %v129
    %v131 = vrot.slane %v126, %v130
    %vm133 = vcmask 261120
    %v135 = vsel %vm133, %v120, 0
    %v138 = vsel %vm133, %v121, 0
    %140 = vmatprep.subr.mxu0 0.0
    %141 = vmatpush1.msra.mxu0 0.0
    %142 = vmatprep.subr.mxu0 0.0
    %143 = vmatpush1.msra.mxu0 0.0
    %144 = vmatprep.subr.mxu0 0.0
    %145 = vmatpush1.msra.mxu0 0.0
    %146 = vmatprep.subr.mxu0 0.0
    %147 = vmatpush1.msra.mxu0 0.0
    %148 = vmatprep.subr.mxu0 0.0
    %149 = vmatpush1.msra.mxu0 0.0
    %150 = vmatprep.subr.mxu0 0.0
    %151 = vmatpush1.msra.mxu0 0.0
    %152 = vmatprep.subr.mxu0 0.0
    %153 = vmatpush1.msra.mxu0 0.0
    %154 = vmatprep.subr.mxu0 0.0
    %155 = vmatpush1.msra.mxu0 0.0
    %156 = vmatprep.subr.mxu0 0.0
    %157 = vmatpush1.msra.mxu0 0.0
    %158 = vmatprep.subr.mxu0 0.0
    %159 = vmatpush1.msra.mxu0 0.0
    %160 = vmatprep.subr.mxu0 0.0
    %161 = vmatpush1.msra.mxu0 0.0
    %162 = vmatprep.subr.mxu0 0.0
    %163 = vmatpush1.msra.mxu0 0.0
    %164 = vmatprep.subr.mxu0 0.0
    %165 = vmatpush1.msra.mxu0 %v125
    %166 = vmatprep.subr.mxu0 0.0
    %167 = vmatpush1.msra.mxu0 %v124
    %168 = vmatprep.subr.mxu0 0.0
    %169 = vmatpush1.msra.mxu0 %v123
    %170 = vmatprep.subr.mxu0 0.0
    %171 = vmatpush1.msra.mxu0 %v122
    %172 = vmatprep.subr.mxu0 0.0
    %173 = vmatpush2.msra.mxu0 0.0
    %174 = vmatprep.subr.mxu0 0.0
    %175 = vmatpush2.msra.mxu0 0.0
    %176 = vmatprep.subr.mxu0 0.0
    %177 = vmatpush2.msra.mxu0 0.0
    %178 = vmatprep.subr.mxu0 0.0
    %179 = vmatpush2.msra.mxu0 0.0
    %180 = vmatprep.subr.mxu0 0.0
    %181 = vmatpush2.msra.mxu0 0.0
    %182 = vmatprep.subr.mxu0 0.0
    %183 = vmatpush2.msra.mxu0 0.0
    %184 = vmatprep.subr.mxu0 0.0
    %185 = vmatpush2.msra.mxu0 0.0
    %186 = vmatprep.subr.mxu0 0.0
    %187 = vmatpush2.msra.mxu0 0.0
    %188 = vmatprep.subr.mxu0 0.0
    %189 = vmatpush2.msra.mxu0 0.0
    %190 = vmatprep.subr.mxu0 0.0
    %191 = vmatpush2.msra.mxu0 0.0
    %192 = vmatprep.subr.mxu0 0.0
    %193 = vmatpush2.msra.mxu0 0.0
    %194 = vmatprep.subr.mxu0 0.0
    %195 = vmatpush2.msra.mxu0 0.0
    %196 = vmatprep.subr.mxu0 0.0
    %197 = vmatpush2.msra.mxu0 0.0
    %198 = vmatprep.subr.mxu0 0.0
    %199 = vmatpush2.msra.mxu0 0.0
    %200 = vmatprep.subr.mxu0 0.0
    %201 = vmatpush2.msra.mxu0 0.0
    %202 = vmatprep.subr.mxu0 0.0
    %203 = vmatpush2.msra.mxu0 0.0
    %204 = vmatprep.mubr.f32.mxu0 0.0
    %205 = vmatmul.mubr.f32.gmra.mxu0 %v135
    %v206 = vpop.f32.mrf.mxu0
    %v207 = vadd.f32 %v131, %v206
    %v208 = vpop.f32.mrf.mxu0
    %209 = vmatprep.mubr.f32.mxu0 0.0
    %210 = vmatmul.mubr.f32.gmra.mxu0 %v138
    %v211 = vpop.f32.mrf.mxu0
    %v212 = vadd.f32 %v131, %v211
    %v213 = vpop.f32.mrf.mxu0
    %214 = vdwg.mxu0
    %v215 = vld [vmem:[#allocation5] sm:$0xff]
    %v216 = vld [vmem:[#allocation5 + $0x8] sm:$0xff]
    %v217 = vld [vmem:[#allocation10] sm:$0xff]
    %v218 = vld [vmem:[#allocation10 + $0x8] sm:$0xff]
    %v219 = vld [vmem:[#allocation10 + $0x10] sm:$0xff]
    %v220 = vld [vmem:[#allocation10 + $0x18] sm:$0xff]
    %v221 = vld [vmem:[%s7] sm:$0x1]
    %v223 = vlaneseq
    %v224 = vshrl.u32 %v223, 7
    %v225 = vsub.s32 0, %v224
    %v226 = vrot.slane %v221, %v225
    %v229 = vsel %vm133, %v215, 0
    %v232 = vsel %vm133, %v216, 0
    %234 = vmatprep.subr.mxu0 0.0
    %235 = vmatpush1.msra.mxu0 0.0
    %236 = vmatprep.subr.mxu0 0.0
    %237 = vmatpush1.msra.mxu0 0.0
    %238 = vmatprep.subr.mxu0 0.0
    %239 = vmatpush1.msra.mxu0 0.0
    %240 = vmatprep.subr.mxu0 0.0
    %241 = vmatpush1.msra.mxu0 0.0
    %242 = vmatprep.subr.mxu0 0.0
    %243 = vmatpush1.msra.mxu0 0.0
    %244 = vmatprep.subr.mxu0 0.0
    %245 = vmatpush1.msra.mxu0 0.0
    %246 = vmatprep.subr.mxu0 0.0
    %247 = vmatpush1.msra.mxu0 0.0
    %248 = vmatprep.subr.mxu0 0.0
    %249 = vmatpush1.msra.mxu0 0.0
    %250 = vmatprep.subr.mxu0 0.0
    %251 = vmatpush1.msra.mxu0 0.0
    %252 = vmatprep.subr.mxu0 0.0
    %253 = vmatpush1.msra.mxu0 0.0
    %254 = vmatprep.subr.mxu0 0.0
    %255 = vmatpush1.msra.mxu0 0.0
    %256 = vmatprep.subr.mxu0 0.0
    %257 = vmatpush1.msra.mxu0 0.0
    %258 = vmatprep.subr.mxu0 0.0
    %259 = vmatpush1.msra.mxu0 %v220
    %260 = vmatprep.subr.mxu0 0.0
    %261 = vmatpush1.msra.mxu0 %v219
    %262 = vmatprep.subr.mxu0 0.0
    %263 = vmatpush1.msra.mxu0 %v218
    %264 = vmatprep.subr.mxu0 0.0
    %265 = vmatpush1.msra.mxu0 %v217
    %266 = vmatprep.subr.mxu0 0.0
    %267 = vmatpush2.msra.mxu0 0.0
    %268 = vmatprep.subr.mxu0 0.0
    %269 = vmatpush2.msra.mxu0 0.0
    %270 = vmatprep.subr.mxu0 0.0
    %271 = vmatpush2.msra.mxu0 0.0
    %272 = vmatprep.subr.mxu0 0.0
    %273 = vmatpush2.msra.mxu0 0.0
    %274 = vmatprep.subr.mxu0 0.0
    %275 = vmatpush2.msra.mxu0 0.0
    %276 = vmatprep.subr.mxu0 0.0
    %277 = vmatpush2.msra.mxu0 0.0
    %278 = vmatprep.subr.mxu0 0.0
    %279 = vmatpush2.msra.mxu0 0.0
    %280 = vmatprep.subr.mxu0 0.0
    %281 = vmatpush2.msra.mxu0 0.0
    %282 = vmatprep.subr.mxu0 0.0
    %283 = vmatpush2.msra.mxu0 0.0
    %284 = vmatprep.subr.mxu0 0.0
    %285 = vmatpush2.msra.mxu0 0.0
    %286 = vmatprep.subr.mxu0 0.0
    %287 = vmatpush2.msra.mxu0 0.0
    %288 = vmatprep.subr.mxu0 0.0
    %289 = vmatpush2.msra.mxu0 0.0
    %290 = vmatprep.subr.mxu0 0.0
    %291 = vmatpush2.msra.mxu0 0.0
    %292 = vmatprep.subr.mxu0 0.0
    %293 = vmatpush2.msra.mxu0 0.0
    %294 = vmatprep.subr.mxu0 0.0
    %295 = vmatpush2.msra.mxu0 0.0
    %296 = vmatprep.subr.mxu0 0.0
    %297 = vmatpush2.msra.mxu0 0.0
    %298 = vmatprep.mubr.f32.mxu0 0.0
    %299 = vmatmul.mubr.f32.gmra.mxu0 %v229
    %v300 = vpop.f32.mrf.mxu0
    %v301 = vadd.f32 %v226, %v300
    %v302 = vpop.f32.mrf.mxu0
    %303 = vmatprep.mubr.f32.mxu0 0.0
    %304 = vmatmul.mubr.f32.gmra.mxu0 %v232
    %v305 = vpop.f32.mrf.mxu0
    %v306 = vadd.f32 %v226, %v305
    %v307 = vpop.f32.mrf.mxu0
    %308 = vdwg.mxu0
    %v309 = vld [vmem:[#allocation7] sm:$0xff]
    %v310 = vld [vmem:[#allocation7 + $0x8] sm:$0xff]
    %v311 = vld [vmem:[#allocation11] sm:$0xff]
    %v312 = vld [vmem:[#allocation11 + $0x8] sm:$0xff]
    %v313 = vld [vmem:[#allocation11 + $0x10] sm:$0xff]
    %v314 = vld [vmem:[#allocation11 + $0x18] sm:$0xff]
    %v315 = vld [vmem:[%s8] sm:$0x1]
    %v317 = vlaneseq
    %v318 = vshrl.u32 %v317, 7
    %v319 = vsub.s32 0, %v318
    %v320 = vrot.slane %v315, %v319
    %v323 = vsel %vm133, %v309, 0
    %v326 = vsel %vm133, %v310, 0
    %328 = vmatprep.subr.mxu0 0.0
    %329 = vmatpush1.msra.mxu0 0.0
    %330 = vmatprep.subr.mxu0 0.0
    %331 = vmatpush1.msra.mxu0 0.0
    %332 = vmatprep.subr.mxu0 0.0
    %333 = vmatpush1.msra.mxu0 0.0
    %334 = vmatprep.subr.mxu0 0.0
    %335 = vmatpush1.msra.mxu0 0.0
    %336 = vmatprep.subr.mxu0 0.0
    %337 = vmatpush1.msra.mxu0 0.0
    %338 = vmatprep.subr.mxu0 0.0
    %339 = vmatpush1.msra.mxu0 0.0
    %340 = vmatprep.subr.mxu0 0.0
    %341 = vmatpush1.msra.mxu0 0.0
    %342 = vmatprep.subr.mxu0 0.0
    %343 = vmatpush1.msra.mxu0 0.0
    %344 = vmatprep.subr.mxu0 0.0
    %345 = vmatpush1.msra.mxu0 0.0
    %346 = vmatprep.subr.mxu0 0.0
    %347 = vmatpush1.msra.mxu0 0.0
    %348 = vmatprep.subr.mxu0 0.0
    %349 = vmatpush1.msra.mxu0 0.0
    %350 = vmatprep.subr.mxu0 0.0
    %351 = vmatpush1.msra.mxu0 0.0
    %352 = vmatprep.subr.mxu0 0.0
    %353 = vmatpush1.msra.mxu0 %v314
    %354 = vmatprep.subr.mxu0 0.0
    %355 = vmatpush1.msra.mxu0 %v313
    %356 = vmatprep.subr.mxu0 0.0
    %357 = vmatpush1.msra.mxu0 %v312
    %358 = vmatprep.subr.mxu0 0.0
    %359 = vmatpush1.msra.mxu0 %v311
    %360 = vmatprep.subr.mxu0 0.0
    %361 = vmatpush2.msra.mxu0 0.0
    %362 = vmatprep.subr.mxu0 0.0
    %363 = vmatpush2.msra.mxu0 0.0
    %364 = vmatprep.subr.mxu0 0.0
    %365 = vmatpush2.msra.mxu0 0.0
    %366 = vmatprep.subr.mxu0 0.0
    %367 = vmatpush2.msra.mxu0 0.0
    %368 = vmatprep.subr.mxu0 0.0
    %369 = vmatpush2.msra.mxu0 0.0
    %370 = vmatprep.subr.mxu0 0.0
    %371 = vmatpush2.msra.mxu0 0.0
    %372 = vmatprep.subr.mxu0 0.0
    %373 = vmatpush2.msra.mxu0 0.0
    %374 = vmatprep.subr.mxu0 0.0
    %375 = vmatpush2.msra.mxu0 0.0
    %376 = vmatprep.subr.mxu0 0.0
    %377 = vmatpush2.msra.mxu0 0.0
    %378 = vmatprep.subr.mxu0 0.0
    %379 = vmatpush2.msra.mxu0 0.0
    %380 = vmatprep.subr.mxu0 0.0
    %381 = vmatpush2.msra.mxu0 0.0
    %382 = vmatprep.subr.mxu0 0.0
    %383 = vmatpush2.msra.mxu0 0.0
    %384 = vmatprep.subr.mxu0 0.0
    %385 = vmatpush2.msra.mxu0 0.0
    %386 = vmatprep.subr.mxu0 0.0
    %387 = vmatpush2.msra.mxu0 0.0
    %388 = vmatprep.subr.mxu0 0.0
    %389 = vmatpush2.msra.mxu0 0.0
    %390 = vmatprep.subr.mxu0 0.0
    %391 = vmatpush2.msra.mxu0 0.0
    %392 = vmatprep.mubr.f32.mxu0 0.0
    %393 = vmatmul.mubr.f32.gmra.mxu0 %v323
    %v394 = vpop.f32.mrf.mxu0
    %v395 = vadd.f32 %v320, %v394
    %v396 = vpop.f32.mrf.mxu0
    %397 = vmatprep.mubr.f32.mxu0 0.0
    %398 = vmatmul.mubr.f32.gmra.mxu0 %v326
    %v399 = vpop.f32.mrf.mxu0
    %v400 = vadd.f32 %v320, %v399
    %v401 = vpop.f32.mrf.mxu0
    %402 = vdwg.mxu0
    %403 = vst.msk [vmem:[#allocation13] sm:$0xff] %vm133, %v207
    %404 = vst.msk [vmem:[#allocation13 + $0x8] sm:$0xff] %vm133, %v212
    %405 = vst.msk [vmem:[#allocation14] sm:$0xff] %vm133, %v301
    %406 = vst.msk [vmem:[#allocation14 + $0x8] sm:$0xff] %vm133, %v306
    %407 = vst [vmem:[#allocation16] sm:$0xff] %v395
    %408 = vst [vmem:[#allocation16 + $0x8] sm:$0xff] %v400
    %v409 = vmul.f32 %v301, %v301
    %v410 = vmul.f32 %v306, %v306
    %v411 = vsel %vm133, %v409, 0.0
    %412 = vadd.xlane.f32.xlu0 %v411
    %v413 = vpop.xlane.xlu0 %412
    %v414 = vsel %vm133, %v410, 0.0
    %415 = vadd.xlane.f32.xlu0 %v414
    %v416 = vpop.xlane.xlu0 %415
    %v417 = vmul.f32 %v413, -0.088388346
    %v418 = vmul.f32 %v416, -0.088388346
    %vm419 = vcmask 7168
    %420 = vst.msk [vmem:[%s12] sm:$0xff] %vm419, %v417
    %421 = vst.msk [vmem:[%s12 + $0x8] sm:$0xff] %vm419, %v418
    // Predicated region
    $region62: #{tpu_custom_call.1} parent=1 // pred_check
      _
    $region63: #{tpu_custom_call.1} parent=1 // pred_check_branch
      %423 = sbr.rel (0) target = $region65
    $region64: #{tpu_custom_call.1} parent=1 // pred_region
      %s425 = ssub.s32 256, 256
      %426 = vsyncadd [#allocation4], %s425
      %s427 = sshll.u32 [#allocation13], 4
      %s428 = int_to_ptr.vmem [resolvable:$true] %s427
      %433 = dma.vmem_to_hbm [thread:$0]  %s428, 256, %s9, [#allocation4], 128, 128, 8
    $region65: #{tpu_custom_call.1} parent=1 // pred_fallthru
      _
    // Predicated region
    $region66: #{tpu_custom_call.1} parent=1 // pred_check
      _
    $region67: #{tpu_custom_call.1} parent=1 // pred_check_branch
      %435 = sbr.rel (0) target = $region69
    $region68: #{tpu_custom_call.1} parent=1 // pred_region
      %s437 = ssub.s32 256, 256
      %438 = vsyncadd [#allocation15], %s437
      %s439 = sshll.u32 [#allocation14], 4
      %s440 = int_to_ptr.vmem [resolvable:$true] %s439
      %445 = dma.vmem_to_hbm [thread:$0]  %s440, 256, %s10, [#allocation15], 128, 128, 8
    $region69: #{tpu_custom_call.1} parent=1 // pred_fallthru
      _
    // Predicated region
    $region70: #{tpu_custom_call.1} parent=1 // pred_check
      _
    $region71: #{tpu_custom_call.1} parent=1 // pred_check_branch
      %447 = sbr.rel (0) target = $region73
    $region72: #{tpu_custom_call.1} parent=1 // pred_region
      %s449 = ssub.s32 256, 256
      %450 = vsyncadd [#allocation15], %s449
      %s451 = sshll.u32 [#allocation16], 4
      %s452 = int_to_ptr.vmem [resolvable:$true] %s451
      %457 = dma.vmem_to_hbm [thread:$0]  %s452, 256, %s11, [#allocation15], 128, 128, 8
    $region73: #{tpu_custom_call.1} parent=1 // pred_fallthru
      _
    // Predicated region
    $region74: #{tpu_custom_call.1} parent=1 // pred_check
      _
    $region75: #{tpu_custom_call.1} parent=1 // pred_check_branch
      %459 = sbr.rel (0) target = $region77
    $region76: #{tpu_custom_call.1} parent=1 // pred_region
      _
    $region77: #{tpu_custom_call.1} parent=1 // pred_fallthru
      _
    // Predicated region
    $region78: #{tpu_custom_call.1} parent=1 // pred_check
      _
    $region79: #{tpu_custom_call.1} parent=1 // pred_check_branch
      %461 = sbr.rel (0) target = $region81
    $region80: #{tpu_custom_call.1} parent=1 // pred_region
      %462 = dma.done [#allocation4], 256
    $region81: #{tpu_custom_call.1} parent=1 // pred_fallthru
      _
    // Predicated region
    $region82: #{tpu_custom_call.1} parent=1 // pred_check
      _
    $region83: #{tpu_custom_call.1} parent=1 // pred_check_branch
      %464 = sbr.rel (0) target = $region85
    $region84: #{tpu_custom_call.1} parent=1 // pred_region
      %465 = dma.done [#allocation15], 256
    $region85: #{tpu_custom_call.1} parent=1 // pred_fallthru
      _
    // Predicated region
    $region86: #{tpu_custom_call.1} parent=1 // pred_check
      _
    $region87: #{tpu_custom_call.1} parent=1 // pred_check_branch
      %467 = sbr.rel (0) target = $region89
    $region88: #{tpu_custom_call.1} parent=1 // pred_region
      %468 = dma.done [#allocation15], 256
    $region89: #{tpu_custom_call.1} parent=1 // pred_fallthru
      _
    // Predicated region
    $region90: #{tpu_custom_call.1} parent=1 // pred_check
      _
    $region91: #{tpu_custom_call.1} parent=1 // pred_check_branch
      %470 = sbr.rel (0) target = $region93
    $region92: #{tpu_custom_call.1} parent=1 // pred_region
      _
    $region93: #{tpu_custom_call.1} parent=1 // pred_fallthru
      _
    %471 = vsyncpa [#allocation3], 1
    %472 = vsyncpa [#allocation6], 1
    %473 = vsyncpa [#allocation9], 1
    %474 = vsyncpa [#allocation12], 1
    %475 = vsyncpa [#allocation4], 1
    %476 = vsyncpa [#allocation15], 1

</llo_original>
